<compile_context>
chip_gen: v6e
topology: v6e:2x2x1
jax: 0.10.0
libtpu: 0.0.40
codegen_flags: <defaults>
</compile_context>

<pallas_src>
import functools

import jax
import jax.numpy as jnp
from jax.experimental import pallas as pl
from jax.experimental.pallas import tpu as pltpu

INPUT_DIM = 4
HIDDEN_DIM = 32
OUTPUT_DIM = 4

# Lane-dense padded sizes (multiples of 128).
HIDDEN_PAD = 128
OUTPUT_PAD = 128


def _round_up(n, m):
    return ((n + m - 1) // m) * m


def mlp_kernel(x_ref, w1_ref, b1_ref, w2_ref, b2_ref, o_ref):
    x = x_ref[...]                      # (TB, INPUT_DIM) f32
    tb = x.shape[0]
    hid = w1_ref.shape[1]               # HIDDEN_PAD

    # ---- Layer 1 on the VPU: K=4 contraction as 4 broadcast FMAs ----
    # Start the accumulator from the (broadcast) bias, hoisted once per tile.
    h = jnp.broadcast_to(b1_ref[...], (tb, hid))
    for k in range(x.shape[1]):         # static 4-way unroll
        h = h + x[:, k:k + 1] * w1_ref[k:k + 1, :]
    h = jnp.maximum(h, 0.0)             # ReLU (padded hidden cols stay 0)

    # ---- Layer 2 on the MXU: (TB,128) @ (128,128), f32 accumulate ----
    out = jnp.dot(h, w2_ref[...], preferred_element_type=jnp.float32)
    out = out + b2_ref[...]
    o_ref[...] = out.astype(o_ref.dtype)   # lane-dense (TB, 128) store


def _pad2d(a, rows, cols):
    pr, pc = rows - a.shape[0], cols - a.shape[1]
    if pr or pc:
        a = jnp.pad(a, ((0, pr), (0, pc)))
    return a


@functools.partial(jax.jit, static_argnames=("tb",))
def neural_network_forward(x, w1, b1, w2, b2, *, tb=512):
    """x: (B, INPUT_DIM) f32, w1: (IN, HID), b1: (HID,), w2: (HID, OUT), b2: (OUT,)."""
    B = x.shape[0]

    # Batch tile: multiple of 8 sublanes, capped at the requested size.
    TB = min(tb, _round_up(B, 8))
    B_pad = _round_up(B, TB)

    # Zero-pad operands to lane-dense / tile-aligned shapes.
    x_p = jnp.pad(x, ((0, B_pad - B), (0, 0)))
    w1_p = _pad2d(w1, INPUT_DIM, HIDDEN_PAD)
    b1_p = _pad2d(b1.reshape(1, -1), 1, HIDDEN_PAD)
    w2_p = _pad2d(w2, HIDDEN_PAD, OUTPUT_PAD)
    b2_p = _pad2d(b2.reshape(1, -1), 1, OUTPUT_PAD)

    grid = (B_pad // TB,)

    out_p = pl.pallas_call(
        mlp_kernel,
        out_shape=jax.ShapeDtypeStruct((B_pad, OUTPUT_PAD), jnp.float32),
        grid_spec=pltpu.PrefetchScalarGridSpec(
            num_scalar_prefetch=0,
            grid=grid,
            in_specs=[
                pl.BlockSpec((TB, INPUT_DIM), lambda i: (i, 0)),       # x tile
                pl.BlockSpec((INPUT_DIM, HIDDEN_PAD), lambda i: (0, 0)),  # W1 (resident)
                pl.BlockSpec((1, HIDDEN_PAD), lambda i: (0, 0)),        # b1 (resident)
                pl.BlockSpec((HIDDEN_PAD, OUTPUT_PAD), lambda i: (0, 0)),  # W2 (resident)
                pl.BlockSpec((1, OUTPUT_PAD), lambda i: (0, 0)),        # b2 (resident)
            ],
            out_specs=pl.BlockSpec((TB, OUTPUT_PAD), lambda i: (i, 0)),
        ),
        compiler_params=pltpu.CompilerParams(
            dimension_semantics=("parallel",),
        ),
    )(x_p, w1_p, b1_p, w2_p, b2_p)

    # Strip batch padding and the lane padding of the output dim.
    return out_p[:B, :OUTPUT_DIM]


def init_params(key):
    """Deterministic init mimicking nn.Linear default (uniform in +-1/sqrt(fan_in))."""
    k1, k2, k3, k4 = jax.random.split(key, 4)
    lim1 = 1.0 / jnp.sqrt(INPUT_DIM)
    lim2 = 1.0 / jnp.sqrt(HIDDEN_DIM)
    # stored as (in_dim, out_dim), i.e. transposed relative to torch's (out, in)
    w1 = jax.random.uniform(k1, (INPUT_DIM, HIDDEN_DIM), jnp.float32, -lim1, lim1)
    b1 = jax.random.uniform(k2, (HIDDEN_DIM,), jnp.float32, -lim1, lim1)
    w2 = jax.random.uniform(k3, (HIDDEN_DIM, OUTPUT_DIM), jnp.float32, -lim2, lim2)
    b2 = jax.random.uniform(k4, (OUTPUT_DIM,), jnp.float32, -lim2, lim2)
    return w1, b1, w2, b2


if __name__ == "__main__":
    key = jax.random.PRNGKey(0)
    kx, kp = jax.random.split(key)
    batch = 8
    x = jax.random.normal(kx, (batch, INPUT_DIM), jnp.float32)
    w1, b1, w2, b2 = init_params(kp)

    out = neural_network_forward(x, w1, b1, w2, b2)
    out = jax.block_until_ready(out)

    # Pure-JAX reference for sanity check
    ref = jnp.maximum(x @ w1 + b1, 0.0) @ w2 + b2
    assert out.shape == (batch, OUTPUT_DIM)
    assert jnp.allclose(out, ref, atol=1e-5, rtol=1e-5), (
        f"max abs err {jnp.max(jnp.abs(out - ref))}")

    print("KERNEL_OK")
</pallas_src>

<mosaic_0001>
module attributes {stable_mosaic.version = 11 : i64} {
  func.func @mlp_kernel(%arg0: i32, %arg1: memref<8x4xf32, #tpu.memory_space<vmem>>, %arg2: memref<4x128xf32, #tpu.memory_space<vmem>>, %arg3: memref<1x128xf32, #tpu.memory_space<vmem>>, %arg4: memref<128x128xf32, #tpu.memory_space<vmem>>, %arg5: memref<1x128xf32, #tpu.memory_space<vmem>>, %arg6: memref<8x128xf32, #tpu.memory_space<vmem>>) attributes {dimension_semantics = [#tpu.dimension_semantics<parallel>], iteration_bounds = array<i64: 1>, scalar_prefetch = 0 : i64, scratch_operands = 0 : i64, tpu.core_type = #tpu.core_type<tc>, window_params = [{transform_indices = @transform_0, window_bounds = array<i64: 8, 4>}, {pipeline_mode = #tpu.pipeline_mode<synchronous>, transform_indices = @transform_1, window_bounds = array<i64: 4, 128>}, {pipeline_mode = #tpu.pipeline_mode<synchronous>, transform_indices = @transform_2, window_bounds = array<i64: 1, 128>}, {pipeline_mode = #tpu.pipeline_mode<synchronous>, transform_indices = @transform_3, window_bounds = array<i64: 128, 128>}, {pipeline_mode = #tpu.pipeline_mode<synchronous>, transform_indices = @transform_4, window_bounds = array<i64: 1, 128>}, {transform_indices = @transform_5, window_bounds = array<i64: 8, 128>}]} {
    %c0 = arith.constant 0 : index
    %c0_0 = arith.constant 0 : index
    %0 = vector.load %arg1[%c0, %c0_0] : memref<8x4xf32, #tpu.memory_space<vmem>>, vector<8x4xf32>
    %c0_1 = arith.constant 0 : index
    %c0_2 = arith.constant 0 : index
    %1 = vector.load %arg3[%c0_1, %c0_2] : memref<1x128xf32, #tpu.memory_space<vmem>>, vector<1x128xf32>
    %2 = vector.shape_cast %1 : vector<1x128xf32> to vector<1x128xf32>
    %3 = vector.broadcast %2 : vector<1x128xf32> to vector<8x128xf32>
    %4 = vector.extract_strided_slice %0 {offsets = [0, 0], sizes = [8, 1], strides = [1, 1]} : vector<8x4xf32> to vector<8x1xf32>
    %c0_3 = arith.constant 0 : index
    %c0_4 = arith.constant 0 : index
    %5 = vector.load %arg2[%c0_3, %c0_4] : memref<4x128xf32, #tpu.memory_space<vmem>>, vector<1x128xf32>
    %6 = vector.broadcast %4 : vector<8x1xf32> to vector<8x128xf32>
    %7 = vector.broadcast %5 : vector<1x128xf32> to vector<8x128xf32>
    %8 = arith.mulf %6, %7 : vector<8x128xf32>
    %9 = arith.addf %3, %8 : vector<8x128xf32>
    %10 = vector.extract_strided_slice %0 {offsets = [0, 1], sizes = [8, 1], strides = [1, 1]} : vector<8x4xf32> to vector<8x1xf32>
    %c1 = arith.constant 1 : index
    %c0_5 = arith.constant 0 : index
    %11 = vector.load %arg2[%c1, %c0_5] : memref<4x128xf32, #tpu.memory_space<vmem>>, vector<1x128xf32>
    %12 = vector.broadcast %10 : vector<8x1xf32> to vector<8x128xf32>
    %13 = vector.broadcast %11 : vector<1x128xf32> to vector<8x128xf32>
    %14 = arith.mulf %12, %13 : vector<8x128xf32>
    %15 = arith.addf %9, %14 : vector<8x128xf32>
    %16 = vector.extract_strided_slice %0 {offsets = [0, 2], sizes = [8, 1], strides = [1, 1]} : vector<8x4xf32> to vector<8x1xf32>
    %c2 = arith.constant 2 : index
    %c0_6 = arith.constant 0 : index
    %17 = vector.load %arg2[%c2, %c0_6] : memref<4x128xf32, #tpu.memory_space<vmem>>, vector<1x128xf32>
    %18 = vector.broadcast %16 : vector<8x1xf32> to vector<8x128xf32>
    %19 = vector.broadcast %17 : vector<1x128xf32> to vector<8x128xf32>
    %20 = arith.mulf %18, %19 : vector<8x128xf32>
    %21 = arith.addf %15, %20 : vector<8x128xf32>
    %22 = vector.extract_strided_slice %0 {offsets = [0, 3], sizes = [8, 1], strides = [1, 1]} : vector<8x4xf32> to vector<8x1xf32>
    %c3 = arith.constant 3 : index
    %c0_7 = arith.constant 0 : index
    %23 = vector.load %arg2[%c3, %c0_7] : memref<4x128xf32, #tpu.memory_space<vmem>>, vector<1x128xf32>
    %24 = vector.broadcast %22 : vector<8x1xf32> to vector<8x128xf32>
    %25 = vector.broadcast %23 : vector<1x128xf32> to vector<8x128xf32>
    %26 = arith.mulf %24, %25 : vector<8x128xf32>
    %27 = arith.addf %21, %26 : vector<8x128xf32>
    %cst = arith.constant 0.000000e+00 : f32
    %28 = vector.broadcast %cst : f32 to vector<8x128xf32>
    %29 = arith.maximumf %27, %28 : vector<8x128xf32>
    %c0_8 = arith.constant 0 : index
    %c0_9 = arith.constant 0 : index
    %30 = vector.load %arg4[%c0_8, %c0_9] : memref<128x128xf32, #tpu.memory_space<vmem>>, vector<128x128xf32>
    %cst_10 = arith.constant dense<0.000000e+00> : vector<8x128xf32>
    %31 = tpu.matmul %29, %30, %cst_10 {dimension_numbers = #tpu.dot_dimension_numbers<[1], [0], [0], [1], [0, 0, 1, 1], [], []>} : vector<8x128xf32>, vector<128x128xf32>, vector<8x128xf32> -> vector<8x128xf32>
    %c0_11 = arith.constant 0 : index
    %c0_12 = arith.constant 0 : index
    %32 = vector.load %arg5[%c0_11, %c0_12] : memref<1x128xf32, #tpu.memory_space<vmem>>, vector<1x128xf32>
    %33 = vector.broadcast %32 : vector<1x128xf32> to vector<8x128xf32>
    %34 = arith.addf %31, %33 : vector<8x128xf32>
    %c0_13 = arith.constant 0 : index
    %c0_14 = arith.constant 0 : index
    %35 = vector.load %arg6[%c0_13, %c0_14] : memref<8x128xf32, #tpu.memory_space<vmem>>, vector<8x128xf32>
    tpu.vector_store %arg6[%c0_13, %c0_14], %34 {strides = array<i32>} : memref<8x128xf32, #tpu.memory_space<vmem>>, vector<8x128xf32>,
    return
  }
  func.func @transform_0(%arg0: i32) -> (i32, i32) {
    %c0_i32 = arith.constant 0 : i32
    %c0_i32_0 = arith.constant 0 : i32
    return %arg0, %c0_i32 : i32, i32
  }
  func.func @transform_1(%arg0: i32) -> (i32, i32) {
    %c0_i32 = arith.constant 0 : i32
    %c0_i32_0 = arith.constant 0 : i32
    %c0_i32_1 = arith.constant 0 : i32
    return %c0_i32, %c0_i32_0 : i32, i32
  }
  func.func @transform_2(%arg0: i32) -> (i32, i32) {
    %c0_i32 = arith.constant 0 : i32
    %c0_i32_0 = arith.constant 0 : i32
    %c0_i32_1 = arith.constant 0 : i32
    return %c0_i32, %c0_i32_0 : i32, i32
  }
  func.func @transform_3(%arg0: i32) -> (i32, i32) {
    %c0_i32 = arith.constant 0 : i32
    %c0_i32_0 = arith.constant 0 : i32
    %c0_i32_1 = arith.constant 0 : i32
    return %c0_i32, %c0_i32_0 : i32, i32
  }
  func.func @transform_4(%arg0: i32) -> (i32, i32) {
    %c0_i32 = arith.constant 0 : i32
    %c0_i32_0 = arith.constant 0 : i32
    %c0_i32_1 = arith.constant 0 : i32
    return %c0_i32, %c0_i32_0 : i32, i32
  }
  func.func @transform_5(%arg0: i32) -> (i32, i32) {
    %c0_i32 = arith.constant 0 : i32
    %c0_i32_0 = arith.constant 0 : i32
    return %arg0, %c0_i32 : i32, i32
  }
}

</mosaic_0001>

<llo_original>
// kernel: neural_network_forward.1
$region0: #{neural_network_forward.1}
  #allocation0 [shape = 'u32[]', space=smem, size = 0x4, offset = 0x4, fixed_abs, tag = 'smem constant byte address 0x4 - core index']
  #allocation1 [shape = 'u32[144,128]{1,0:T(1,128)}', space=vmem, size = 0x12000, scoped, tag = 'internal scratch']
  %s0 = inlined_call_operand.vmem [shape: f32[8,4], index: 0, kind: input, shape index: {}]
  %s1 = inlined_call_operand.vmem [shape: f32[4,128], index: 1, kind: input, shape index: {}]
  %s2 = inlined_call_operand.vmem [shape: f32[1,128], index: 2, kind: input, shape index: {}]
  %s3 = inlined_call_operand.vmem [shape: f32[128,128], index: 3, kind: input, shape index: {}]
  %s4 = inlined_call_operand.vmem [shape: f32[1,128], index: 4, kind: input, shape index: {}]
  %s5 = inlined_call_operand.vmem [shape: f32[8,128], index: 5, kind: output, shape index: {}]
  %s6 = sld [smem:[#allocation0]]
  $region30: #{neural_network_forward.1} parent=0
    _
  %s8 = ssub.s32 1, %s6
  %s9 = scalar_select 0, %s8, %s6
  // Predicated region
  $region2: #{neural_network_forward.1} parent=0 // pred_check
    _
  $region3: #{neural_network_forward.1} parent=0 // pred_check_branch
    %11 = sbr.rel (0) target = $region5
  $region4: #{neural_network_forward.1} parent=0 // pred_region
    _
  $region5: #{neural_network_forward.1} parent=0 // pred_fallthru
    _
  // Predicated region
  $region6: #{neural_network_forward.1} parent=0 // pred_check
    _
  $region7: #{neural_network_forward.1} parent=0 // pred_check_branch
    %13 = sbr.rel (0) target = $region9
  $region8: #{neural_network_forward.1} parent=0 // pred_region
    _
  $region9: #{neural_network_forward.1} parent=0 // pred_fallthru
    _
  // Predicated region
  $region10: #{neural_network_forward.1} parent=0 // pred_check
    _
  $region11: #{neural_network_forward.1} parent=0 // pred_check_branch
    %15 = sbr.rel (0) target = $region13
  $region12: #{neural_network_forward.1} parent=0 // pred_region
    _
  $region13: #{neural_network_forward.1} parent=0 // pred_fallthru
    _
  // Predicated region
  $region14: #{neural_network_forward.1} parent=0 // pred_check
    _
  $region15: #{neural_network_forward.1} parent=0 // pred_check_branch
    %17 = sbr.rel (0) target = $region17
  $region16: #{neural_network_forward.1} parent=0 // pred_region
    _
  $region17: #{neural_network_forward.1} parent=0 // pred_fallthru
    _
  // Predicated region
  $region18: #{neural_network_forward.1} parent=0 // pred_check
    _
  $region19: #{neural_network_forward.1} parent=0 // pred_check_branch
    %19 = sbr.rel (0) target = $region21
  $region20: #{neural_network_forward.1} parent=0 // pred_region
    _
  $region21: #{neural_network_forward.1} parent=0 // pred_fallthru
    _
  %v20 = vld [vmem:[%s0] sm:$0xff]
  %v21 = vld [vmem:[%s2] sm:$0x1]
  %v23 = vlaneseq
  %v24 = vshrl.u32 %v23, 7
  %v25 = vsub.s32 0, %v24
  %v26 = vrot.slane %v21, %v25
  %v28 = vld [vmem:[%s1] sm:$0x1]
  %30 = vset.pattern.permute.xlu0 0
  %31 = vperm.xlu0 %30, %v20
  %v32 = vpop.permute.xlu0 %31
  %v34 = vlaneseq
  %v35 = vshrl.u32 %v34, 7
  %v36 = vsub.s32 0, %v35
  %v37 = vrot.slane %v28, %v36
  %v38 = vmul.f32 %v32, %v37
  %v39 = vadd.f32 %v26, %v38
  %v40 = vld [vmem:[%s1 + $0x1] sm:$0x1]
  %41 = vset.pattern.permute.xlu0 1
  %42 = vperm.xlu0 %41, %v20
  %v43 = vpop.permute.xlu0 %42
  %v45 = vlaneseq
  %v46 = vshrl.u32 %v45, 7
  %v47 = vsub.s32 0, %v46
  %v48 = vrot.slane %v40, %v47
  %v49 = vmul.f32 %v43, %v48
  %v50 = vadd.f32 %v39, %v49
  %v51 = vld [vmem:[%s1 + $0x2] sm:$0x1]
  %52 = vset.pattern.permute.xlu0 2
  %53 = vperm.xlu0 %52, %v20
  %v54 = vpop.permute.xlu0 %53
  %v56 = vlaneseq
  %v57 = vshrl.u32 %v56, 7
  %v58 = vsub.s32 0, %v57
  %v59 = vrot.slane %v51, %v58
  %v60 = vmul.f32 %v54, %v59
  %v61 = vadd.f32 %v50, %v60
  %v62 = vld [vmem:[%s1 + $0x3] sm:$0x1]
  %63 = vset.pattern.permute.xlu0 3
  %64 = vperm.xlu0 %63, %v20
  %v65 = vpop.permute.xlu0 %64
  %v67 = vlaneseq
  %v68 = vshrl.u32 %v67, 7
  %v69 = vsub.s32 0, %v68
  %v70 = vrot.slane %v62, %v69
  %v71 = vmul.f32 %v65, %v70
  %v72 = vadd.f32 %v61, %v71
  %v73 = vmax.f32 %v72, 0.0
  %v74 = vld [vmem:[%s3] sm:$0xff]
  %v75 = vld [vmem:[%s3 + $0x8] sm:$0xff]
  %v76 = vld [vmem:[%s3 + $0x10] sm:$0xff]
  %v77 = vld [vmem:[%s3 + $0x18] sm:$0xff]
  %v78 = vld [vmem:[%s3 + $0x20] sm:$0xff]
  %v79 = vld [vmem:[%s3 + $0x28] sm:$0xff]
  %v80 = vld [vmem:[%s3 + $0x30] sm:$0xff]
  %v81 = vld [vmem:[%s3 + $0x38] sm:$0xff]
  %v82 = vld [vmem:[%s3 + $0x40] sm:$0xff]
  %v83 = vld [vmem:[%s3 + $0x48] sm:$0xff]
  %v84 = vld [vmem:[%s3 + $0x50] sm:$0xff]
  %v85 = vld [vmem:[%s3 + $0x58] sm:$0xff]
  %v86 = vld [vmem:[%s3 + $0x60] sm:$0xff]
  %v87 = vld [vmem:[%s3 + $0x68] sm:$0xff]
  %v88 = vld [vmem:[%s3 + $0x70] sm:$0xff]
  %v89 = vld [vmem:[%s3 + $0x78] sm:$0xff]
  %v90 = vld [vmem:[%s4] sm:$0x1]
  %v92 = vlaneseq
  %v93 = vshrl.u32 %v92, 7
  %v94 = vsub.s32 0, %v93
  %v95 = vrot.slane %v90, %v94
  %97 = vmatprep.subr.mxu0 0.0
  %98 = vmatpush1.msra.mxu0 %v89
  %99 = vmatprep.subr.mxu0 0.0
  %100 = vmatpush1.msra.mxu0 %v88
  %101 = vmatprep.subr.mxu0 0.0
  %102 = vmatpush1.msra.mxu0 %v87
  %103 = vmatprep.subr.mxu0 0.0
  %104 = vmatpush1.msra.mxu0 %v86
  %105 = vmatprep.subr.mxu0 0.0
  %106 = vmatpush1.msra.mxu0 %v85
  %107 = vmatprep.subr.mxu0 0.0
  %108 = vmatpush1.msra.mxu0 %v84
  %109 = vmatprep.subr.mxu0 0.0
  %110 = vmatpush1.msra.mxu0 %v83
  %111 = vmatprep.subr.mxu0 0.0
  %112 = vmatpush1.msra.mxu0 %v82
  %113 = vmatprep.subr.mxu0 0.0
  %114 = vmatpush1.msra.mxu0 %v81
  %115 = vmatprep.subr.mxu0 0.0
  %116 = vmatpush1.msra.mxu0 %v80
  %117 = vmatprep.subr.mxu0 0.0
  %118 = vmatpush1.msra.mxu0 %v79
  %119 = vmatprep.subr.mxu0 0.0
  %120 = vmatpush1.msra.mxu0 %v78
  %121 = vmatprep.subr.mxu0 0.0
  %122 = vmatpush1.msra.mxu0 %v77
  %123 = vmatprep.subr.mxu0 0.0
  %124 = vmatpush1.msra.mxu0 %v76
  %125 = vmatprep.subr.mxu0 0.0
  %126 = vmatpush1.msra.mxu0 %v75
  %127 = vmatprep.subr.mxu0 0.0
  %128 = vmatpush1.msra.mxu0 %v74
  %129 = vmatprep.subr.mxu0 0.0
  %130 = vmatpush2.msra.mxu0 0.0
  %131 = vmatprep.subr.mxu0 0.0
  %132 = vmatpush2.msra.mxu0 0.0
  %133 = vmatprep.subr.mxu0 0.0
  %134 = vmatpush2.msra.mxu0 0.0
  %135 = vmatprep.subr.mxu0 0.0
  %136 = vmatpush2.msra.mxu0 0.0
  %137 = vmatprep.subr.mxu0 0.0
  %138 = vmatpush2.msra.mxu0 0.0
  %139 = vmatprep.subr.mxu0 0.0
  %140 = vmatpush2.msra.mxu0 0.0
  %141 = vmatprep.subr.mxu0 0.0
  %142 = vmatpush2.msra.mxu0 0.0
  %143 = vmatprep.subr.mxu0 0.0
  %144 = vmatpush2.msra.mxu0 0.0
  %145 = vmatprep.subr.mxu0 0.0
  %146 = vmatpush2.msra.mxu0 0.0
  %147 = vmatprep.subr.mxu0 0.0
  %148 = vmatpush2.msra.mxu0 0.0
  %149 = vmatprep.subr.mxu0 0.0
  %150 = vmatpush2.msra.mxu0 0.0
  %151 = vmatprep.subr.mxu0 0.0
  %152 = vmatpush2.msra.mxu0 0.0
  %153 = vmatprep.subr.mxu0 0.0
  %154 = vmatpush2.msra.mxu0 0.0
  %155 = vmatprep.subr.mxu0 0.0
  %156 = vmatpush2.msra.mxu0 0.0
  %157 = vmatprep.subr.mxu0 0.0
  %158 = vmatpush2.msra.mxu0 0.0
  %159 = vmatprep.subr.mxu0 0.0
  %160 = vmatpush2.msra.mxu0 0.0
  %161 = vmatprep.mubr.f32.mxu0 0.0
  %162 = vmatmul.mubr.f32.gmra.mxu0 %v73
  %v163 = vpop.f32.mrf.mxu0
  %v164 = vadd.f32 %v95, %v163
  %v165 = vpop.f32.mrf.mxu0
  %166 = vdwg.mxu0
  %167 = vst [vmem:[%s5] sm:$0xff] %v164
  // Predicated region
  $region22: #{neural_network_forward.1} parent=0 // pred_check
    _
  $region23: #{neural_network_forward.1} parent=0 // pred_check_branch
    %169 = sbr.rel (0) target = $region25
  $region24: #{neural_network_forward.1} parent=0 // pred_region
    _
  $region25: #{neural_network_forward.1} parent=0 // pred_fallthru
    _
  // Predicated region
  $region26: #{neural_network_forward.1} parent=0 // pred_check
    _
  $region27: #{neural_network_forward.1} parent=0 // pred_check_branch
    %171 = sbr.rel (0) target = $region29
  $region28: #{neural_network_forward.1} parent=0 // pred_region
    _
  $region29: #{neural_network_forward.1} parent=0 // pred_fallthru
    _

</llo_original>
